<compile_context>
chip_gen: v6e
topology: v6e:2x2x1
jax: 0.10.0
libtpu: 0.0.40
codegen_flags: <defaults>
</compile_context>

<pallas_src>
import functools

import jax
import jax.numpy as jnp
from jax.experimental import pallas as pl
from jax.experimental.pallas import tpu as pltpu

LANE = 128      # TPU lane width (last-dim tiling unit)
SUBLANE_BF16 = 16  # bf16 sublane packing


def _round_up(n, m):
    return ((n + m - 1) // m) * m


# ----------------------------------------------------------------------------
# Kernel: one batch tile per grid step. Weights/biases are VMEM-resident blocks.
# ----------------------------------------------------------------------------
def bkann_kernel(x_ref, w1_ref, b1_ref, w2_ref, b2_ref, o_ref):
    # hidden layer 1: x @ W1  (bf16 MXU operands, f32 accumulation) + b1 (f32)
    h = jnp.dot(x_ref[...], w1_ref[...], preferred_element_type=jnp.float32)
    h = h + b1_ref[...]                       # b1 is (1, Hp) -> broadcasts over batch
    # sigmoid as a single EUP tanh (keeps VALU issue slots free)
    h = 0.5 * (jnp.tanh(0.5 * h) + 1.0)
    # output layer: h @ W2 + b2 (cast activations to MXU dtype, accumulate in f32)
    out = jnp.dot(h.astype(w2_ref.dtype), w2_ref[...],
                  preferred_element_type=jnp.float32)
    out = out + b2_ref[...]                   # b2 is (1, Op)
    o_ref[...] = out.astype(o_ref.dtype)


# ----------------------------------------------------------------------------
# Parameter init + one-time lane padding / MXU-dtype cast.
# ----------------------------------------------------------------------------
def init_params(key, input_size, hidden_size1, output_size, dtype=jnp.float32):
    """nn.Linear-style U(-1/sqrt(fan_in), 1/sqrt(fan_in)) init (weights stored as
    (in, out), i.e. already transposed vs. PyTorch, so the kernel does x @ W + b)."""
    k1, k2, k3, k4 = jax.random.split(key, 4)
    bound1 = 1.0 / (input_size ** 0.5)
    bound2 = 1.0 / (hidden_size1 ** 0.5)
    w1 = jax.random.uniform(k1, (input_size, hidden_size1), dtype, -bound1, bound1)
    b1 = jax.random.uniform(k2, (hidden_size1,), dtype, -bound1, bound1)
    w2 = jax.random.uniform(k3, (hidden_size1, output_size), dtype, -bound2, bound2)
    b2 = jax.random.uniform(k4, (output_size,), dtype, -bound2, bound2)
    return w1, b1, w2, b2


def pad_params(w1, b1, w2, b2, mxu_dtype=jnp.bfloat16):
    """Zero-pad feature dims to the 128-lane width ONCE (init time) and cast the
    matmul weights to the MXU dtype. Padded bias entries are zero, so padded hidden
    columns produce sigmoid(0)=0.5, which then multiplies zero rows of padded W2 and
    contributes nothing to the (sliced-off) padded output columns."""
    In, H = w1.shape
    O = w2.shape[1]
    In_p, H_p, O_p = _round_up(In, LANE), _round_up(H, LANE), _round_up(O, LANE)
    w1_p = jnp.zeros((In_p, H_p), mxu_dtype).at[:In, :H].set(w1.astype(mxu_dtype))
    w2_p = jnp.zeros((H_p, O_p), mxu_dtype).at[:H, :O].set(w2.astype(mxu_dtype))
    b1_p = jnp.zeros((1, H_p), jnp.float32).at[0, :H].set(b1.astype(jnp.float32))
    b2_p = jnp.zeros((1, O_p), jnp.float32).at[0, :O].set(b2.astype(jnp.float32))
    return w1_p, b1_p, w2_p, b2_p


# ----------------------------------------------------------------------------
# Forward pass wrapper.
# ----------------------------------------------------------------------------
@functools.partial(jax.jit, static_argnames=("out_features", "block_b"))
def bkann_forward(x, w1_p, b1_p, w2_p, b2_p, out_features, block_b=256):
    """x: (B, In) f32; padded params from pad_params(); returns (B, out_features)."""
    B, In = x.shape
    In_p, H_p = w1_p.shape
    O_p = w2_p.shape[1]
    mxu_dtype = w1_p.dtype
    out_dtype = x.dtype

    # Batch tile: multiple of 16 (bf16 sublane packing), capped at block_b.
    tb = min(_round_up(block_b, SUBLANE_BF16), _round_up(B, SUBLANE_BF16))
    B_p = _round_up(B, tb)
    grid = (B_p // tb,)

    # Pad batch + input-feature dims, cast MXU operand to bf16 (zero pads are exact).
    x_p = jnp.zeros((B_p, In_p), mxu_dtype).at[:B, :In].set(x.astype(mxu_dtype))

    itemsz = lambda a: a.size * jnp.dtype(a.dtype).itemsize
    cost = pl.CostEstimate(
        flops=2 * B_p * In_p * H_p + 2 * B_p * H_p * O_p,
        transcendentals=B_p * H_p,  # one tanh per hidden element
        bytes_accessed=int(itemsz(x_p) + itemsz(w1_p) + itemsz(b1_p)
                           + itemsz(w2_p) + itemsz(b2_p)
                           + B_p * O_p * jnp.dtype(out_dtype).itemsize),
    )

    vmem = pltpu.MemorySpace.VMEM
    out_p = pl.pallas_call(
        bkann_kernel,
        out_shape=jax.ShapeDtypeStruct((B_p, O_p), out_dtype),
        grid=grid,
        in_specs=[
            # batch-tiled activations
            pl.BlockSpec((tb, In_p), lambda i: (i, 0), memory_space=vmem),
            # weights / biases: constant index maps -> fetched once, VMEM-resident
            pl.BlockSpec((In_p, H_p), lambda i: (0, 0), memory_space=vmem),
            pl.BlockSpec((1, H_p), lambda i: (0, 0), memory_space=vmem),
            pl.BlockSpec((H_p, O_p), lambda i: (0, 0), memory_space=vmem),
            pl.BlockSpec((1, O_p), lambda i: (0, 0), memory_space=vmem),
        ],
        out_specs=pl.BlockSpec((tb, O_p), lambda i: (i, 0), memory_space=vmem),
        compiler_params=pltpu.CompilerParams(
            # batch tiles are independent -> shard across TensorCores on v7x
            dimension_semantics=("parallel",),
            # explicit scoped-VMEM budget: safe on v5e (16 MiB default) and v7x (64 MiB phys)
            vmem_limit_bytes=32 * 1024 * 1024,
        ),
        cost_estimate=cost,
    )(x_p, w1_p, b1_p, w2_p, b2_p)

    # Strip batch / output-lane padding.
    return out_p[:B, :out_features]


if __name__ == "__main__":
    # Small, module-consistent shapes: batch=8, input=16, hidden1=32, output=4
    batch, input_size, hidden_size1, output_size = 8, 16, 32, 4

    key = jax.random.PRNGKey(0)
    kx, kp = jax.random.split(key)
    x = jax.random.normal(kx, (batch, input_size), jnp.float32)
    w1, b1, w2, b2 = init_params(kp, input_size, hidden_size1, output_size)

    # One-time (init) padding + bf16 cast of MXU operands.
    w1_p, b1_p, w2_p, b2_p = pad_params(w1, b1, w2, b2)

    out = bkann_forward(x, w1_p, b1_p, w2_p, b2_p, out_features=output_size)
    jax.block_until_ready(out)

    # Reference in plain f32 JAX (same math as the PyTorch module).
    ref = jax.nn.sigmoid(x @ w1 + b1) @ w2 + b2
    assert out.shape == (batch, output_size)
    # bf16 MXU operands -> loosened tolerance (f32 accumulation keeps it tight-ish).
    assert jnp.allclose(out, ref, atol=3e-2, rtol=3e-2), (
        f"max abs err {jnp.max(jnp.abs(out - ref))}")

    print("KERNEL_OK")
</pallas_src>

<mosaic_0001>
module attributes {stable_mosaic.version = 11 : i64} {
  func.func @bkann_kernel(%arg0: i32, %arg1: memref<16x128xbf16, #tpu.memory_space<vmem>>, %arg2: memref<128x128xbf16, #tpu.memory_space<vmem>>, %arg3: memref<1x128xf32, #tpu.memory_space<vmem>>, %arg4: memref<128x128xbf16, #tpu.memory_space<vmem>>, %arg5: memref<1x128xf32, #tpu.memory_space<vmem>>, %arg6: memref<16x128xf32, #tpu.memory_space<vmem>>) attributes {dimension_semantics = [#tpu.dimension_semantics<parallel>], iteration_bounds = array<i64: 1>, scalar_prefetch = 0 : i64, scratch_operands = 0 : i64, tpu.core_type = #tpu.core_type<tc>, window_params = [{transform_indices = @transform_0, window_bounds = array<i64: 16, 128>}, {pipeline_mode = #tpu.pipeline_mode<synchronous>, transform_indices = @transform_1, window_bounds = array<i64: 128, 128>}, {pipeline_mode = #tpu.pipeline_mode<synchronous>, transform_indices = @transform_2, window_bounds = array<i64: 1, 128>}, {pipeline_mode = #tpu.pipeline_mode<synchronous>, transform_indices = @transform_3, window_bounds = array<i64: 128, 128>}, {pipeline_mode = #tpu.pipeline_mode<synchronous>, transform_indices = @transform_4, window_bounds = array<i64: 1, 128>}, {transform_indices = @transform_5, window_bounds = array<i64: 16, 128>}]} {
    %c0 = arith.constant 0 : index
    %c0_0 = arith.constant 0 : index
    %0 = vector.load %arg1[%c0, %c0_0] : memref<16x128xbf16, #tpu.memory_space<vmem>>, vector<16x128xbf16>
    %c0_1 = arith.constant 0 : index
    %c0_2 = arith.constant 0 : index
    %1 = vector.load %arg2[%c0_1, %c0_2] : memref<128x128xbf16, #tpu.memory_space<vmem>>, vector<128x128xbf16>
    %cst = arith.constant dense<0.000000e+00> : vector<16x128xf32>
    %2 = tpu.matmul %0, %1, %cst {dimension_numbers = #tpu.dot_dimension_numbers<[1], [0], [0], [1], [0, 0, 1, 1], [], []>} : vector<16x128xbf16>, vector<128x128xbf16>, vector<16x128xf32> -> vector<16x128xf32>
    %c0_3 = arith.constant 0 : index
    %c0_4 = arith.constant 0 : index
    %3 = vector.load %arg3[%c0_3, %c0_4] : memref<1x128xf32, #tpu.memory_space<vmem>>, vector<1x128xf32>
    %4 = vector.broadcast %3 : vector<1x128xf32> to vector<16x128xf32>
    %5 = arith.addf %2, %4 : vector<16x128xf32>
    %cst_5 = arith.constant 5.000000e-01 : f32
    %6 = vector.broadcast %cst_5 : f32 to vector<16x128xf32>
    %7 = arith.mulf %6, %5 : vector<16x128xf32>
    %8 = math.tanh %7 : vector<16x128xf32>
    %cst_6 = arith.constant 1.000000e+00 : f32
    %9 = vector.broadcast %cst_6 : f32 to vector<16x128xf32>
    %10 = arith.addf %8, %9 : vector<16x128xf32>
    %cst_7 = arith.constant 5.000000e-01 : f32
    %11 = vector.broadcast %cst_7 : f32 to vector<16x128xf32>
    %12 = arith.mulf %11, %10 : vector<16x128xf32>
    %13 = arith.truncf %12 : vector<16x128xf32> to vector<16x128xbf16>
    %c0_8 = arith.constant 0 : index
    %c0_9 = arith.constant 0 : index
    %14 = vector.load %arg4[%c0_8, %c0_9] : memref<128x128xbf16, #tpu.memory_space<vmem>>, vector<128x128xbf16>
    %cst_10 = arith.constant dense<0.000000e+00> : vector<16x128xf32>
    %15 = tpu.matmul %13, %14, %cst_10 {dimension_numbers = #tpu.dot_dimension_numbers<[1], [0], [0], [1], [0, 0, 1, 1], [], []>} : vector<16x128xbf16>, vector<128x128xbf16>, vector<16x128xf32> -> vector<16x128xf32>
    %c0_11 = arith.constant 0 : index
    %c0_12 = arith.constant 0 : index
    %16 = vector.load %arg5[%c0_11, %c0_12] : memref<1x128xf32, #tpu.memory_space<vmem>>, vector<1x128xf32>
    %17 = vector.broadcast %16 : vector<1x128xf32> to vector<16x128xf32>
    %18 = arith.addf %15, %17 : vector<16x128xf32>
    %c0_13 = arith.constant 0 : index
    %c0_14 = arith.constant 0 : index
    %19 = vector.load %arg6[%c0_13, %c0_14] : memref<16x128xf32, #tpu.memory_space<vmem>>, vector<16x128xf32>
    tpu.vector_store %arg6[%c0_13, %c0_14], %18 {strides = array<i32>} : memref<16x128xf32, #tpu.memory_space<vmem>>, vector<16x128xf32>,
    return
  }
  func.func @transform_0(%arg0: i32) -> (i32, i32) {
    %c0_i32 = arith.constant 0 : i32
    %c0_i32_0 = arith.constant 0 : i32
    return %arg0, %c0_i32 : i32, i32
  }
  func.func @transform_1(%arg0: i32) -> (i32, i32) {
    %c0_i32 = arith.constant 0 : i32
    %c0_i32_0 = arith.constant 0 : i32
    %c0_i32_1 = arith.constant 0 : i32
    return %c0_i32, %c0_i32_0 : i32, i32
  }
  func.func @transform_2(%arg0: i32) -> (i32, i32) {
    %c0_i32 = arith.constant 0 : i32
    %c0_i32_0 = arith.constant 0 : i32
    %c0_i32_1 = arith.constant 0 : i32
    return %c0_i32, %c0_i32_0 : i32, i32
  }
  func.func @transform_3(%arg0: i32) -> (i32, i32) {
    %c0_i32 = arith.constant 0 : i32
    %c0_i32_0 = arith.constant 0 : i32
    %c0_i32_1 = arith.constant 0 : i32
    return %c0_i32, %c0_i32_0 : i32, i32
  }
  func.func @transform_4(%arg0: i32) -> (i32, i32) {
    %c0_i32 = arith.constant 0 : i32
    %c0_i32_0 = arith.constant 0 : i32
    %c0_i32_1 = arith.constant 0 : i32
    return %c0_i32, %c0_i32_0 : i32, i32
  }
  func.func @transform_5(%arg0: i32) -> (i32, i32) {
    %c0_i32 = arith.constant 0 : i32
    %c0_i32_0 = arith.constant 0 : i32
    return %arg0, %c0_i32 : i32, i32
  }
}

</mosaic_0001>

<llo_original>
// kernel: bkann_forward.1
$region0: #{bkann_forward.1}
  #allocation0 [shape = 'u32[]', space=smem, size = 0x4, offset = 0x4, fixed_abs, tag = 'smem constant byte address 0x4 - core index']
  #allocation1 [shape = 'u32[144,128]{1,0:T(1,128)}', space=vmem, size = 0x12000, scoped, tag = 'internal scratch']
  %s0 = inlined_call_operand.vmem [shape: bf16[16,128], index: 0, kind: input, shape index: {}]
  %s1 = inlined_call_operand.hbm [shape: bf16[128,128], index: 1, kind: input, shape index: {}]
  %s2 = inlined_call_operand.vmem [shape: f32[1,128], index: 2, kind: input, shape index: {}]
  %s3 = inlined_call_operand.hbm [shape: bf16[128,128], index: 3, kind: input, shape index: {}]
  %s4 = inlined_call_operand.vmem [shape: f32[1,128], index: 4, kind: input, shape index: {}]
  %s5 = inlined_call_operand.vmem [shape: f32[16,128], index: 5, kind: output, shape index: {}]
  %s6 = sld [smem:[#allocation0]]
  $region38: #{bkann_forward.1} parent=0
    _
  %s8 = ssub.s32 1, %s6
  %s9 = scalar_select 0, %s8, %s6
  $region1: #{bkann_forward.1} parent=0
    #allocation2 [shape = 'u8[32768]{0}', space=vmem, size = 0x8000, scoped, tag = 'input window, operand 1, single buffered']
    #allocation3 [shape = 's32[1]{0}', space=sflag, size = 0x4, scoped, tag = 'scoped memory for bkann_forward.1']
    #allocation4 [shape = 'u8[32768]{0}', space=vmem, size = 0x8000, scoped, tag = 'input window, operand 3, single buffered']
    #allocation5 [shape = 's32[1]{0}', space=sflag, size = 0x4, scoped, tag = 'scoped memory for bkann_forward.1']
    %10 = vsyncpa [#allocation3], 0
    %11 = vsyncpa [#allocation5], 0
    // Predicated region
    $region2: #{bkann_forward.1} parent=1 // pred_check
      _
    $region3: #{bkann_forward.1} parent=1 // pred_check_branch
      %13 = sbr.rel (0) target = $region5
    $region4: #{bkann_forward.1} parent=1 // pred_region
      _
    $region5: #{bkann_forward.1} parent=1 // pred_fallthru
      _
    // Predicated region
    $region6: #{bkann_forward.1} parent=1 // pred_check
      _
    $region7: #{bkann_forward.1} parent=1 // pred_check_branch
      %15 = sbr.rel (0) target = $region9
    $region8: #{bkann_forward.1} parent=1 // pred_region
      %s17 = ssub.s32 1024, 1024
      %18 = vsyncadd [#allocation3], %s17
      %s19 = sshll.u32 [#allocation2], 4
      %s20 = int_to_ptr.vmem [resolvable:$true] %s19
      %25 = dma.hbm_to_vmem [thread:$0]  %s1, 1024, %s20, [#allocation3], 64, 64, 4
    $region9: #{bkann_forward.1} parent=1 // pred_fallthru
      _
    // Predicated region
    $region10: #{bkann_forward.1} parent=1 // pred_check
      _
    $region11: #{bkann_forward.1} parent=1 // pred_check_branch
      %27 = sbr.rel (0) target = $region13
    $region12: #{bkann_forward.1} parent=1 // pred_region
      _
    $region13: #{bkann_forward.1} parent=1 // pred_fallthru
      _
    // Predicated region
    $region14: #{bkann_forward.1} parent=1 // pred_check
      _
    $region15: #{bkann_forward.1} parent=1 // pred_check_branch
      %29 = sbr.rel (0) target = $region17
    $region16: #{bkann_forward.1} parent=1 // pred_region
      %s31 = ssub.s32 1024, 1024
      %32 = vsyncadd [#allocation5], %s31
      %s33 = sshll.u32 [#allocation4], 4
      %s34 = int_to_ptr.vmem [resolvable:$true] %s33
      %39 = dma.hbm_to_vmem [thread:$0]  %s3, 1024, %s34, [#allocation5], 64, 64, 4
    $region17: #{bkann_forward.1} parent=1 // pred_fallthru
      _
    // Predicated region
    $region18: #{bkann_forward.1} parent=1 // pred_check
      _
    $region19: #{bkann_forward.1} parent=1 // pred_check_branch
      %41 = sbr.rel (0) target = $region21
    $region20: #{bkann_forward.1} parent=1 // pred_region
      _
    $region21: #{bkann_forward.1} parent=1 // pred_fallthru
      _
    // Predicated region
    $region22: #{bkann_forward.1} parent=1 // pred_check
      _
    $region23: #{bkann_forward.1} parent=1 // pred_check_branch
      %43 = sbr.rel (0) target = $region25
    $region24: #{bkann_forward.1} parent=1 // pred_region
      %44 = dma.done [#allocation3], 1024
    $region25: #{bkann_forward.1} parent=1 // pred_fallthru
      _
    // Predicated region
    $region26: #{bkann_forward.1} parent=1 // pred_check
      _
    $region27: #{bkann_forward.1} parent=1 // pred_check_branch
      %46 = sbr.rel (0) target = $region29
    $region28: #{bkann_forward.1} parent=1 // pred_region
      %47 = dma.done [#allocation5], 1024
    $region29: #{bkann_forward.1} parent=1 // pred_fallthru
      _
    %v49 = vld [vmem:[%s0] sm:$0xf]
    %v50 = vld [vmem:[%s0 + $0x4] sm:$0xf]
    %v51 = vld [vmem:[#allocation2] sm:$0xf]
    %v52 = vld [vmem:[#allocation2 + $0x4] sm:$0xf]
    %v53 = vld [vmem:[#allocation2 + $0x8] sm:$0xf]
    %v54 = vld [vmem:[#allocation2 + $0xc] sm:$0xf]
    %v55 = vld [vmem:[#allocation2 + $0x10] sm:$0xf]
    %v56 = vld [vmem:[#allocation2 + $0x14] sm:$0xf]
    %v57 = vld [vmem:[#allocation2 + $0x18] sm:$0xf]
    %v58 = vld [vmem:[#allocation2 + $0x1c] sm:$0xf]
    %v59 = vld [vmem:[#allocation2 + $0x20] sm:$0xf]
    %v60 = vld [vmem:[#allocation2 + $0x24] sm:$0xf]
    %v61 = vld [vmem:[#allocation2 + $0x28] sm:$0xf]
    %v62 = vld [vmem:[#allocation2 + $0x2c] sm:$0xf]
    %v63 = vld [vmem:[#allocation2 + $0x30] sm:$0xf]
    %v64 = vld [vmem:[#allocation2 + $0x34] sm:$0xf]
    %v65 = vld [vmem:[#allocation2 + $0x38] sm:$0xf]
    %v66 = vld [vmem:[#allocation2 + $0x3c] sm:$0xf]
    %v67 = vld [vmem:[%s2] sm:$0x1]
    %v69 = vlaneseq
    %v70 = vshrl.u32 %v69, 7
    %v71 = vsub.s32 0, %v70
    %v72 = vrot.slane %v67, %v71
    %v76 = vunpack.c.l.b16 %v49
    %v77 = vunpack.c.l.b16 %v50
    %v78 = vpack.c.b16 %v77, %v76
    %v96 = vunpack.c.l.b16 %v51
    %v97 = vunpack.c.l.b16 %v52
    %v98 = vunpack.c.l.b16 %v53
    %v99 = vunpack.c.l.b16 %v54
    %v100 = vunpack.c.l.b16 %v55
    %v101 = vunpack.c.l.b16 %v56
    %v102 = vunpack.c.l.b16 %v57
    %v103 = vunpack.c.l.b16 %v58
    %v104 = vunpack.c.l.b16 %v59
    %v105 = vunpack.c.l.b16 %v60
    %v106 = vunpack.c.l.b16 %v61
    %v107 = vunpack.c.l.b16 %v62
    %v108 = vunpack.c.l.b16 %v63
    %v109 = vunpack.c.l.b16 %v64
    %v110 = vunpack.c.l.b16 %v65
    %v111 = vunpack.c.l.b16 %v66
    %v112 = vpack.c.b16 %v97, %v96
    %v113 = vpack.c.b16 %v99, %v98
    %v114 = vpack.c.b16 %v101, %v100
    %v115 = vpack.c.b16 %v103, %v102
    %v116 = vpack.c.b16 %v105, %v104
    %v117 = vpack.c.b16 %v107, %v106
    %v118 = vpack.c.b16 %v109, %v108
    %v119 = vpack.c.b16 %v111, %v110
    %128 = vmatprep.subr.bf16.mxu0 0
    %129 = vmatpush1.bf16.msra.mxu0 %v119
    %130 = vmatprep.subr.bf16.mxu0 0
    %131 = vmatpush1.bf16.msra.mxu0 %v118
    %132 = vmatprep.subr.bf16.mxu0 0
    %133 = vmatpush1.bf16.msra.mxu0 %v117
    %134 = vmatprep.subr.bf16.mxu0 0
    %135 = vmatpush1.bf16.msra.mxu0 %v116
    %136 = vmatprep.subr.bf16.mxu0 0
    %137 = vmatpush1.bf16.msra.mxu0 %v115
    %138 = vmatprep.subr.bf16.mxu0 0
    %139 = vmatpush1.bf16.msra.mxu0 %v114
    %140 = vmatprep.subr.bf16.mxu0 0
    %141 = vmatpush1.bf16.msra.mxu0 %v113
    %142 = vmatprep.subr.bf16.mxu0 0
    %143 = vmatpush1.bf16.msra.mxu0 %v112
    %144 = vmatprep.subr.bf16.mxu0 0
    %145 = vmatpush2.bf16.msra.mxu0 0
    %146 = vmatprep.subr.bf16.mxu0 0
    %147 = vmatpush2.bf16.msra.mxu0 0
    %148 = vmatprep.subr.bf16.mxu0 0
    %149 = vmatpush2.bf16.msra.mxu0 0
    %150 = vmatprep.subr.bf16.mxu0 0
    %151 = vmatpush2.bf16.msra.mxu0 0
    %152 = vmatprep.subr.bf16.mxu0 0
    %153 = vmatpush2.bf16.msra.mxu0 0
    %154 = vmatprep.subr.bf16.mxu0 0
    %155 = vmatpush2.bf16.msra.mxu0 0
    %156 = vmatprep.subr.bf16.mxu0 0
    %157 = vmatpush2.bf16.msra.mxu0 0
    %158 = vmatprep.subr.bf16.mxu0 0
    %159 = vmatpush2.bf16.msra.mxu0 0
    %160 = vmatprep.mubr.bf16.mxu0 0
    %161 = vmatmul.mubr.bf16.gmra.mxu0 %v78
    %v162 = vpop.f32.mrf.mxu0
    %v163 = vadd.f32 %v72, %v162
    %v164 = vpop.f32.mrf.mxu0
    %v165 = vpop.f32.mrf.mxu0
    %v166 = vadd.f32 %v72, %v165
    %v167 = vpop.f32.mrf.mxu0
    %168 = vdwg.mxu0
    %v169 = vmul.f32 %v163, 0.5
    %v170 = vmul.f32 %v166, 0.5
    %v171 = vtanh.pop %v169
    %v172 = vtanh.pop %v170
    %v173 = vadd.f32 %v171, 1.0
    %v174 = vadd.f32 %v172, 1.0
    %v175 = vmul.f32 %v173, 0.5
    %v176 = vmul.f32 %v174, 0.5
    %v177 = vpack.c.bf16 %v176, %v175
    %v178 = vld [vmem:[#allocation4] sm:$0xf]
    %v179 = vld [vmem:[#allocation4 + $0x4] sm:$0xf]
    %v180 = vld [vmem:[#allocation4 + $0x8] sm:$0xf]
    %v181 = vld [vmem:[#allocation4 + $0xc] sm:$0xf]
    %v182 = vld [vmem:[#allocation4 + $0x10] sm:$0xf]
    %v183 = vld [vmem:[#allocation4 + $0x14] sm:$0xf]
    %v184 = vld [vmem:[#allocation4 + $0x18] sm:$0xf]
    %v185 = vld [vmem:[#allocation4 + $0x1c] sm:$0xf]
    %v186 = vld [vmem:[#allocation4 + $0x20] sm:$0xf]
    %v187 = vld [vmem:[#allocation4 + $0x24] sm:$0xf]
    %v188 = vld [vmem:[#allocation4 + $0x28] sm:$0xf]
    %v189 = vld [vmem:[#allocation4 + $0x2c] sm:$0xf]
    %v190 = vld [vmem:[#allocation4 + $0x30] sm:$0xf]
    %v191 = vld [vmem:[#allocation4 + $0x34] sm:$0xf]
    %v192 = vld [vmem:[#allocation4 + $0x38] sm:$0xf]
    %v193 = vld [vmem:[#allocation4 + $0x3c] sm:$0xf]
    %v194 = vld [vmem:[%s4] sm:$0x1]
    %v196 = vlaneseq
    %v197 = vshrl.u32 %v196, 7
    %v198 = vsub.s32 0, %v197
    %v199 = vrot.slane %v194, %v198
    %v217 = vunpack.c.l.b16 %v178
    %v218 = vunpack.c.l.b16 %v179
    %v219 = vunpack.c.l.b16 %v180
    %v220 = vunpack.c.l.b16 %v181
    %v221 = vunpack.c.l.b16 %v182
    %v222 = vunpack.c.l.b16 %v183
    %v223 = vunpack.c.l.b16 %v184
    %v224 = vunpack.c.l.b16 %v185
    %v225 = vunpack.c.l.b16 %v186
    %v226 = vunpack.c.l.b16 %v187
    %v227 = vunpack.c.l.b16 %v188
    %v228 = vunpack.c.l.b16 %v189
    %v229 = vunpack.c.l.b16 %v190
    %v230 = vunpack.c.l.b16 %v191
    %v231 = vunpack.c.l.b16 %v192
    %v232 = vunpack.c.l.b16 %v193
    %v233 = vpack.c.b16 %v218, %v217
    %v234 = vpack.c.b16 %v220, %v219
    %v235 = vpack.c.b16 %v222, %v221
    %v236 = vpack.c.b16 %v224, %v223
    %v237 = vpack.c.b16 %v226, %v225
    %v238 = vpack.c.b16 %v228, %v227
    %v239 = vpack.c.b16 %v230, %v229
    %v240 = vpack.c.b16 %v232, %v231
    %249 = vmatprep.subr.bf16.mxu0 0
    %250 = vmatpush1.bf16.msra.mxu0 %v240
    %251 = vmatprep.subr.bf16.mxu0 0
    %252 = vmatpush1.bf16.msra.mxu0 %v239
    %253 = vmatprep.subr.bf16.mxu0 0
    %254 = vmatpush1.bf16.msra.mxu0 %v238
    %255 = vmatprep.subr.bf16.mxu0 0
    %256 = vmatpush1.bf16.msra.mxu0 %v237
    %257 = vmatprep.subr.bf16.mxu0 0
    %258 = vmatpush1.bf16.msra.mxu0 %v236
    %259 = vmatprep.subr.bf16.mxu0 0
    %260 = vmatpush1.bf16.msra.mxu0 %v235
    %261 = vmatprep.subr.bf16.mxu0 0
    %262 = vmatpush1.bf16.msra.mxu0 %v234
    %263 = vmatprep.subr.bf16.mxu0 0
    %264 = vmatpush1.bf16.msra.mxu0 %v233
    %265 = vmatprep.subr.bf16.mxu0 0
    %266 = vmatpush2.bf16.msra.mxu0 0
    %267 = vmatprep.subr.bf16.mxu0 0
    %268 = vmatpush2.bf16.msra.mxu0 0
    %269 = vmatprep.subr.bf16.mxu0 0
    %270 = vmatpush2.bf16.msra.mxu0 0
    %271 = vmatprep.subr.bf16.mxu0 0
    %272 = vmatpush2.bf16.msra.mxu0 0
    %273 = vmatprep.subr.bf16.mxu0 0
    %274 = vmatpush2.bf16.msra.mxu0 0
    %275 = vmatprep.subr.bf16.mxu0 0
    %276 = vmatpush2.bf16.msra.mxu0 0
    %277 = vmatprep.subr.bf16.mxu0 0
    %278 = vmatpush2.bf16.msra.mxu0 0
    %279 = vmatprep.subr.bf16.mxu0 0
    %280 = vmatpush2.bf16.msra.mxu0 0
    %281 = vmatprep.mubr.bf16.mxu0 0
    %282 = vmatmul.mubr.bf16.gmra.mxu0 %v177
    %v283 = vpop.f32.mrf.mxu0
    %v284 = vadd.f32 %v199, %v283
    %v285 = vpop.f32.mrf.mxu0
    %v286 = vpop.f32.mrf.mxu0
    %v287 = vadd.f32 %v199, %v286
    %v288 = vpop.f32.mrf.mxu0
    %289 = vdwg.mxu0
    %290 = vst [vmem:[%s5] sm:$0xff] %v284
    %291 = vst [vmem:[%s5 + $0x8] sm:$0xff] %v287
    // Predicated region
    $region30: #{bkann_forward.1} parent=1 // pred_check
      _
    $region31: #{bkann_forward.1} parent=1 // pred_check_branch
      %293 = sbr.rel (0) target = $region33
    $region32: #{bkann_forward.1} parent=1 // pred_region
      _
    $region33: #{bkann_forward.1} parent=1 // pred_fallthru
      _
    // Predicated region
    $region34: #{bkann_forward.1} parent=1 // pred_check
      _
    $region35: #{bkann_forward.1} parent=1 // pred_check_branch
      %295 = sbr.rel (0) target = $region37
    $region36: #{bkann_forward.1} parent=1 // pred_region
      _
    $region37: #{bkann_forward.1} parent=1 // pred_fallthru
      _
    %296 = vsyncpa [#allocation3], 1
    %297 = vsyncpa [#allocation5], 1

</llo_original>
